<compile_context>
chip_gen: v7x
topology: tpu7x:2x2x1
jax: 0.10.0
libtpu: 0.0.40
codegen_flags: <defaults>
</compile_context>

<pallas_src>
import functools

import jax
import jax.numpy as jnp
from jax.experimental import pallas as pl
from jax.experimental.pallas import tpu as pltpu


def _gmsd_kernel(dis_ref, ref_ref, ndis_ref, nref_ref, sum_ref, m2_ref, *,
                 c, noise_std, out_rows_total, strip_out_rows):
    # dis_ref / ref_ref  : (S+2, Wd, C) f32   pooled strip (2-row halo included)
    # ndis_ref / nref_ref: (S+2, Wd, C) bf16  Gaussian noise for the same rows
    # sum_ref / m2_ref   : (1, 1) f32         per-(batch, strip) partial stats
    rows, wd, ch = dis_ref.shape
    so = strip_out_rows          # gradient output rows owned by this strip
    wo = wd - 2

    def hypersphere(x_ref, n_ref):
        # Channel-wise L2 normalize, add noise, re-normalize.  The omitted
        # global scales (*255, 0.25) cancel in the first rsqrt normalization.
        x = x_ref[...]
        inv = jax.lax.rsqrt(jnp.sum(x * x, axis=-1, keepdims=True))
        xn = x * inv + noise_std * n_ref[...].astype(jnp.float32)
        inv2 = jax.lax.rsqrt(jnp.sum(xn * xn, axis=-1, keepdims=True))
        return xn * inv2                                      # (rows, Wd, C)

    def grad_mag_sq(a):
        # Depthwise 3x3 valid convs with hx = [[1,0,-1]]*3 / 3, hy = hx^T; the
        # two 1/3 factors are folded into a single 1/9 on the squared sum.
        cdiff = a[:, 0:wo, :] - a[:, 2:wd, :]                 # (rows, Wo, C)
        gx = cdiff[0:so] + cdiff[1:so + 1] + cdiff[2:so + 2]  # (So, Wo, C)
        rdiff = a[0:so] - a[2:so + 2]                         # (So, Wd, C)
        gy = rdiff[:, 0:wo, :] + rdiff[:, 1:wo + 1, :] + rdiff[:, 2:wd, :]
        return (gx * gx + gy * gy) * (1.0 / 9.0)              # (So, Wo, C)

    md_sq = grad_mag_sq(hypersphere(dis_ref, ndis_ref))
    mr_sq = grad_mag_sq(hypersphere(ref_ref, nref_ref))

    # 2*mr*md fused into one sqrt (both magnitudes are non-negative).
    gms = (2.0 * jnp.sqrt(mr_sq * md_sq) + c) / (mr_sq + md_sq + c)

    # Mask gradient rows that belong to the edge-padding of the last strip,
    # then emit numerically-stable partial statistics (Chan combine on host).
    valid_rows = jnp.minimum(so, out_rows_total - pl.program_id(1) * so)
    row_ids = jax.lax.broadcasted_iota(jnp.int32, gms.shape, 0)
    valid = row_ids < valid_rows
    n_valid = (valid_rows * (wo * ch)).astype(jnp.float32)

    s = jnp.sum(jnp.where(valid, gms, 0.0))
    d = jnp.where(valid, gms - s / n_valid, 0.0)
    sum_ref[...] = jnp.reshape(s, (1, 1))
    m2_ref[...] = jnp.reshape(jnp.sum(d * d), (1, 1))


def gmsd_loss(dis_img, ref_img, key=None, *, c=170.0, noise_std=0.01):
    """dis_img, ref_img: [B, C, H, W] (NCHW).  Returns scalar GMSD (std of GMS)."""
    B, C, H, W = dis_img.shape
    assert ref_img.shape == dis_img.shape
    assert H % 2 == 0 and W % 2 == 0, "even spatial dims assumed"
    hd, wd = H // 2, W // 2
    assert hd >= 3 and wd >= 3, "need H, W >= 6 for the valid 3x3 gradient conv"
    if key is None:
        key = jax.random.PRNGKey(0)

    out_rows = hd - 2
    wo = wd - 2

    # Strip size: ~2 MiB of pooled f32 rows per input per step (fits the 32 MiB
    # scoped-VMEM budget on v5e/v6e/v7x with double-buffered inputs + temps).
    bytes_per_row = wd * C * 4
    S = int(max(1, min(out_rows, (2 * 1024 * 1024) // max(1, bytes_per_row))))
    nstrips = -(-out_rows // S)          # ceil
    rows_needed = nstrips * S + 2        # pooled rows incl. halo of last strip

    def pool(x):
        # NCHW -> 2x2 stride-2 pooled, channels-last (B, Hd, Wd, C), f32.
        # 0.25 factor / *255 rescale omitted (cancel in channel L2 norm).
        x = x.astype(jnp.float32).reshape(B, C, hd, 2, wd, 2).sum(axis=(3, 5))
        return jnp.transpose(x, (0, 2, 3, 1))

    def to_strips(x):
        # (B, Hd, Wd, C) -> (B, nstrips, S+2, Wd, C); overlapping strips with a
        # 2-row halo; last strip edge-padded (padded rows are masked in-kernel).
        pad = rows_needed - hd
        if pad > 0:
            edge = jnp.broadcast_to(x[:, -1:], (B, pad, wd, C)).astype(x.dtype)
            x = jnp.concatenate([x, edge], axis=1)
        if nstrips == 1:
            return x[:, None]
        idx = jnp.arange(nstrips)[:, None] * S + jnp.arange(S + 2)[None, :]
        return x[:, idx]

    # Host-side Gaussian noise (bf16 is plenty for a 0.01-std perturbation of
    # unit-norm features); cast to f32 inside the kernel.
    k_d, k_r = jax.random.split(key)
    noise_d = jax.random.normal(k_d, (B, hd, wd, C), jnp.bfloat16)
    noise_r = jax.random.normal(k_r, (B, hd, wd, C), jnp.bfloat16)

    dis_s = to_strips(pool(dis_img))
    ref_s = to_strips(pool(ref_img))
    nd_s = to_strips(noise_d)
    nr_s = to_strips(noise_r)

    kernel = functools.partial(
        _gmsd_kernel, c=float(c), noise_std=float(noise_std),
        out_rows_total=out_rows, strip_out_rows=S)

    img_spec = pl.BlockSpec((None, None, S + 2, wd, C),
                            lambda b, s: (b, s, 0, 0, 0))
    part_spec = pl.BlockSpec((None, None, 1, 1), lambda b, s: (b, s, 0, 0))

    part_sum, part_m2 = pl.pallas_call(
        kernel,
        out_shape=(jax.ShapeDtypeStruct((B, nstrips, 1, 1), jnp.float32),
                   jax.ShapeDtypeStruct((B, nstrips, 1, 1), jnp.float32)),
        grid=(B, nstrips),
        in_specs=[img_spec, img_spec, img_spec, img_spec],
        out_specs=[part_spec, part_spec],
        compiler_params=pltpu.CompilerParams(
            dimension_semantics=("parallel", "parallel"),
            vmem_limit_bytes=32 * 1024 * 1024,
        ),
    )(dis_s, ref_s, nd_s, nr_s)

    # Tiny cross-(batch, strip) combine: Chan's parallel-variance formula with
    # unequal per-strip counts; unbiased (N-1) std matches torch.std's default.
    strip_rows = jnp.minimum(S, out_rows - jnp.arange(nstrips) * S)
    counts = (strip_rows * (wo * C)).astype(jnp.float32)[None, :]   # (1, nstrips)
    sums = part_sum.reshape(B, nstrips)
    m2s = part_m2.reshape(B, nstrips)
    n_total = float(B * out_rows * wo * C)
    total_mean = jnp.sum(sums) / n_total
    means = sums / counts
    m2 = jnp.sum(m2s) + jnp.sum(counts * (means - total_mean) ** 2)
    return jnp.sqrt(m2 / (n_total - 1.0))


if __name__ == "__main__":
    key = jax.random.PRNGKey(0)
    k_dis, k_ref, k_noise = jax.random.split(key, 3)
    # num_channels=128 matches the module default (the depthwise convs require
    # input channels == num_channels); small batch/spatial dims for the demo.
    B, C, H, W = 2, 128, 16, 16
    dis = jax.random.uniform(k_dis, (B, C, H, W), jnp.float32)  # max <= 1 path
    ref = jax.random.uniform(k_ref, (B, C, H, W), jnp.float32)

    gmsd = jax.jit(gmsd_loss)(dis, ref, k_noise)
    gmsd = jax.block_until_ready(gmsd)
    assert bool(jnp.isfinite(gmsd))
    print("KERNEL_OK")
</pallas_src>

<mosaic_0001>
module attributes {stable_mosaic.version = 11 : i64} {
  func.func @_gmsd_kernel(%arg0: i32, %arg1: i32, %arg2: memref<1x1x8x8x128xf32, #tpu.memory_space<vmem>>, %arg3: memref<1x1x8x8x128xf32, #tpu.memory_space<vmem>>, %arg4: memref<1x1x8x8x128xbf16, #tpu.memory_space<vmem>>, %arg5: memref<1x1x8x8x128xbf16, #tpu.memory_space<vmem>>, %arg6: memref<1x1x1x1xf32, #tpu.memory_space<vmem>>, %arg7: memref<1x1x1x1xf32, #tpu.memory_space<vmem>>) attributes {dimension_semantics = [#tpu.dimension_semantics<parallel>, #tpu.dimension_semantics<parallel>], iteration_bounds = array<i64: 2, 1>, scalar_prefetch = 0 : i64, scratch_operands = 0 : i64, tpu.core_type = #tpu.core_type<tc>, window_params = [{transform_indices = @transform_0, window_bounds = array<i64: 1, 1, 8, 8, 128>}, {transform_indices = @transform_1, window_bounds = array<i64: 1, 1, 8, 8, 128>}, {transform_indices = @transform_2, window_bounds = array<i64: 1, 1, 8, 8, 128>}, {transform_indices = @transform_3, window_bounds = array<i64: 1, 1, 8, 8, 128>}, {transform_indices = @transform_4, window_bounds = array<i64: 1, 1, 1, 1>}, {transform_indices = @transform_5, window_bounds = array<i64: 1, 1, 1, 1>}]} {
    %c0 = arith.constant 0 : index
    %c0_0 = arith.constant 0 : index
    %c0_1 = arith.constant 0 : index
    %c0_2 = arith.constant 0 : index
    %c0_3 = arith.constant 0 : index
    %0 = vector.load %arg2[%c0, %c0_0, %c0_1, %c0_2, %c0_3] : memref<1x1x8x8x128xf32, #tpu.memory_space<vmem>>, vector<1x1x8x8x128xf32>
    %1 = vector.shape_cast %0 : vector<1x1x8x8x128xf32> to vector<8x8x128xf32>
    %2 = arith.mulf %1, %1 : vector<8x8x128xf32>
    %cst = arith.constant dense<0.000000e+00> : vector<8x8xf32>
    %3 = vector.multi_reduction <add>, %2, %cst [2] : vector<8x8x128xf32> to vector<8x8xf32>
    %4 = vector.shape_cast %3 : vector<8x8xf32> to vector<8x8x1xf32>
    %5 = math.rsqrt %4 : vector<8x8x1xf32>
    %6 = vector.broadcast %5 : vector<8x8x1xf32> to vector<8x8x128xf32>
    %7 = arith.mulf %1, %6 : vector<8x8x128xf32>
    %c0_4 = arith.constant 0 : index
    %c0_5 = arith.constant 0 : index
    %c0_6 = arith.constant 0 : index
    %c0_7 = arith.constant 0 : index
    %c0_8 = arith.constant 0 : index
    %8 = vector.load %arg4[%c0_4, %c0_5, %c0_6, %c0_7, %c0_8] : memref<1x1x8x8x128xbf16, #tpu.memory_space<vmem>>, vector<1x1x8x8x128xbf16>
    %9 = vector.shape_cast %8 : vector<1x1x8x8x128xbf16> to vector<8x8x128xbf16>
    %10 = arith.extf %9 : vector<8x8x128xbf16> to vector<8x8x128xf32>
    %cst_9 = arith.constant 0.00999999977 : f32
    %11 = vector.broadcast %cst_9 : f32 to vector<8x8x128xf32>
    %12 = arith.mulf %11, %10 : vector<8x8x128xf32>
    %13 = arith.addf %7, %12 : vector<8x8x128xf32>
    %14 = arith.mulf %13, %13 : vector<8x8x128xf32>
    %cst_10 = arith.constant dense<0.000000e+00> : vector<8x8xf32>
    %15 = vector.multi_reduction <add>, %14, %cst_10 [2] : vector<8x8x128xf32> to vector<8x8xf32>
    %16 = vector.shape_cast %15 : vector<8x8xf32> to vector<8x8x1xf32>
    %17 = math.rsqrt %16 : vector<8x8x1xf32>
    %18 = vector.broadcast %17 : vector<8x8x1xf32> to vector<8x8x128xf32>
    %19 = arith.mulf %13, %18 : vector<8x8x128xf32>
    %20 = vector.extract_strided_slice %19 {offsets = [0, 0, 0], sizes = [8, 6, 128], strides = [1, 1, 1]} : vector<8x8x128xf32> to vector<8x6x128xf32>
    %21 = vector.extract_strided_slice %19 {offsets = [0, 2, 0], sizes = [8, 6, 128], strides = [1, 1, 1]} : vector<8x8x128xf32> to vector<8x6x128xf32>
    %22 = arith.subf %20, %21 : vector<8x6x128xf32>
    %23 = vector.extract_strided_slice %22 {offsets = [0, 0, 0], sizes = [6, 6, 128], strides = [1, 1, 1]} : vector<8x6x128xf32> to vector<6x6x128xf32>
    %24 = vector.extract_strided_slice %22 {offsets = [1, 0, 0], sizes = [6, 6, 128], strides = [1, 1, 1]} : vector<8x6x128xf32> to vector<6x6x128xf32>
    %25 = arith.addf %23, %24 : vector<6x6x128xf32>
    %26 = vector.extract_strided_slice %22 {offsets = [2, 0, 0], sizes = [6, 6, 128], strides = [1, 1, 1]} : vector<8x6x128xf32> to vector<6x6x128xf32>
    %27 = arith.addf %25, %26 : vector<6x6x128xf32>
    %28 = vector.extract_strided_slice %19 {offsets = [0, 0, 0], sizes = [6, 8, 128], strides = [1, 1, 1]} : vector<8x8x128xf32> to vector<6x8x128xf32>
    %29 = vector.extract_strided_slice %19 {offsets = [2, 0, 0], sizes = [6, 8, 128], strides = [1, 1, 1]} : vector<8x8x128xf32> to vector<6x8x128xf32>
    %30 = arith.subf %28, %29 : vector<6x8x128xf32>
    %31 = vector.extract_strided_slice %30 {offsets = [0, 0, 0], sizes = [6, 6, 128], strides = [1, 1, 1]} : vector<6x8x128xf32> to vector<6x6x128xf32>
    %32 = vector.extract_strided_slice %30 {offsets = [0, 1, 0], sizes = [6, 6, 128], strides = [1, 1, 1]} : vector<6x8x128xf32> to vector<6x6x128xf32>
    %33 = arith.addf %31, %32 : vector<6x6x128xf32>
    %34 = vector.extract_strided_slice %30 {offsets = [0, 2, 0], sizes = [6, 6, 128], strides = [1, 1, 1]} : vector<6x8x128xf32> to vector<6x6x128xf32>
    %35 = arith.addf %33, %34 : vector<6x6x128xf32>
    %36 = arith.mulf %27, %27 : vector<6x6x128xf32>
    %37 = arith.mulf %35, %35 : vector<6x6x128xf32>
    %38 = arith.addf %36, %37 : vector<6x6x128xf32>
    %cst_11 = arith.constant 0.111111112 : f32
    %39 = vector.broadcast %cst_11 : f32 to vector<6x6x128xf32>
    %40 = arith.mulf %38, %39 : vector<6x6x128xf32>
    %c0_12 = arith.constant 0 : index
    %c0_13 = arith.constant 0 : index
    %c0_14 = arith.constant 0 : index
    %c0_15 = arith.constant 0 : index
    %c0_16 = arith.constant 0 : index
    %41 = vector.load %arg3[%c0_12, %c0_13, %c0_14, %c0_15, %c0_16] : memref<1x1x8x8x128xf32, #tpu.memory_space<vmem>>, vector<1x1x8x8x128xf32>
    %42 = vector.shape_cast %41 : vector<1x1x8x8x128xf32> to vector<8x8x128xf32>
    %43 = arith.mulf %42, %42 : vector<8x8x128xf32>
    %cst_17 = arith.constant dense<0.000000e+00> : vector<8x8xf32>
    %44 = vector.multi_reduction <add>, %43, %cst_17 [2] : vector<8x8x128xf32> to vector<8x8xf32>
    %45 = vector.shape_cast %44 : vector<8x8xf32> to vector<8x8x1xf32>
    %46 = math.rsqrt %45 : vector<8x8x1xf32>
    %47 = vector.broadcast %46 : vector<8x8x1xf32> to vector<8x8x128xf32>
    %48 = arith.mulf %42, %47 : vector<8x8x128xf32>
    %c0_18 = arith.constant 0 : index
    %c0_19 = arith.constant 0 : index
    %c0_20 = arith.constant 0 : index
    %c0_21 = arith.constant 0 : index
    %c0_22 = arith.constant 0 : index
    %49 = vector.load %arg5[%c0_18, %c0_19, %c0_20, %c0_21, %c0_22] : memref<1x1x8x8x128xbf16, #tpu.memory_space<vmem>>, vector<1x1x8x8x128xbf16>
    %50 = vector.shape_cast %49 : vector<1x1x8x8x128xbf16> to vector<8x8x128xbf16>
    %51 = arith.extf %50 : vector<8x8x128xbf16> to vector<8x8x128xf32>
    %cst_23 = arith.constant 0.00999999977 : f32
    %52 = vector.broadcast %cst_23 : f32 to vector<8x8x128xf32>
    %53 = arith.mulf %52, %51 : vector<8x8x128xf32>
    %54 = arith.addf %48, %53 : vector<8x8x128xf32>
    %55 = arith.mulf %54, %54 : vector<8x8x128xf32>
    %cst_24 = arith.constant dense<0.000000e+00> : vector<8x8xf32>
    %56 = vector.multi_reduction <add>, %55, %cst_24 [2] : vector<8x8x128xf32> to vector<8x8xf32>
    %57 = vector.shape_cast %56 : vector<8x8xf32> to vector<8x8x1xf32>
    %58 = math.rsqrt %57 : vector<8x8x1xf32>
    %59 = vector.broadcast %58 : vector<8x8x1xf32> to vector<8x8x128xf32>
    %60 = arith.mulf %54, %59 : vector<8x8x128xf32>
    %61 = vector.extract_strided_slice %60 {offsets = [0, 0, 0], sizes = [8, 6, 128], strides = [1, 1, 1]} : vector<8x8x128xf32> to vector<8x6x128xf32>
    %62 = vector.extract_strided_slice %60 {offsets = [0, 2, 0], sizes = [8, 6, 128], strides = [1, 1, 1]} : vector<8x8x128xf32> to vector<8x6x128xf32>
    %63 = arith.subf %61, %62 : vector<8x6x128xf32>
    %64 = vector.extract_strided_slice %63 {offsets = [0, 0, 0], sizes = [6, 6, 128], strides = [1, 1, 1]} : vector<8x6x128xf32> to vector<6x6x128xf32>
    %65 = vector.extract_strided_slice %63 {offsets = [1, 0, 0], sizes = [6, 6, 128], strides = [1, 1, 1]} : vector<8x6x128xf32> to vector<6x6x128xf32>
    %66 = arith.addf %64, %65 : vector<6x6x128xf32>
    %67 = vector.extract_strided_slice %63 {offsets = [2, 0, 0], sizes = [6, 6, 128], strides = [1, 1, 1]} : vector<8x6x128xf32> to vector<6x6x128xf32>
    %68 = arith.addf %66, %67 : vector<6x6x128xf32>
    %69 = vector.extract_strided_slice %60 {offsets = [0, 0, 0], sizes = [6, 8, 128], strides = [1, 1, 1]} : vector<8x8x128xf32> to vector<6x8x128xf32>
    %70 = vector.extract_strided_slice %60 {offsets = [2, 0, 0], sizes = [6, 8, 128], strides = [1, 1, 1]} : vector<8x8x128xf32> to vector<6x8x128xf32>
    %71 = arith.subf %69, %70 : vector<6x8x128xf32>
    %72 = vector.extract_strided_slice %71 {offsets = [0, 0, 0], sizes = [6, 6, 128], strides = [1, 1, 1]} : vector<6x8x128xf32> to vector<6x6x128xf32>
    %73 = vector.extract_strided_slice %71 {offsets = [0, 1, 0], sizes = [6, 6, 128], strides = [1, 1, 1]} : vector<6x8x128xf32> to vector<6x6x128xf32>
    %74 = arith.addf %72, %73 : vector<6x6x128xf32>
    %75 = vector.extract_strided_slice %71 {offsets = [0, 2, 0], sizes = [6, 6, 128], strides = [1, 1, 1]} : vector<6x8x128xf32> to vector<6x6x128xf32>
    %76 = arith.addf %74, %75 : vector<6x6x128xf32>
    %77 = arith.mulf %68, %68 : vector<6x6x128xf32>
    %78 = arith.mulf %76, %76 : vector<6x6x128xf32>
    %79 = arith.addf %77, %78 : vector<6x6x128xf32>
    %cst_25 = arith.constant 0.111111112 : f32
    %80 = vector.broadcast %cst_25 : f32 to vector<6x6x128xf32>
    %81 = arith.mulf %79, %80 : vector<6x6x128xf32>
    %82 = arith.mulf %81, %40 : vector<6x6x128xf32>
    %83 = math.sqrt %82 : vector<6x6x128xf32>
    %cst_26 = arith.constant 2.000000e+00 : f32
    %84 = vector.broadcast %cst_26 : f32 to vector<6x6x128xf32>
    %85 = arith.mulf %84, %83 : vector<6x6x128xf32>
    %cst_27 = arith.constant 1.700000e+02 : f32
    %86 = vector.broadcast %cst_27 : f32 to vector<6x6x128xf32>
    %87 = arith.addf %85, %86 : vector<6x6x128xf32>
    %88 = arith.addf %81, %40 : vector<6x6x128xf32>
    %cst_28 = arith.constant 1.700000e+02 : f32
    %89 = vector.broadcast %cst_28 : f32 to vector<6x6x128xf32>
    %90 = arith.addf %88, %89 : vector<6x6x128xf32>
    %91 = arith.divf %87, %90 : vector<6x6x128xf32>
    %c6_i32 = arith.constant 6 : i32
    %92 = arith.muli %arg1, %c6_i32 : i32
    %c6_i32_29 = arith.constant 6 : i32
    %93 = arith.subi %c6_i32_29, %92 : i32
    %c6_i32_30 = arith.constant 6 : i32
    %94 = arith.minsi %c6_i32_30, %93 : i32
    %95 = tpu.iota {dimensions = array<i32: 0>} : vector<6x6x128xi32>
    %96 = vector.broadcast %94 : i32 to vector<6x6x128xi32>
    %97 = arith.cmpi slt, %95, %96 : vector<6x6x128xi32>
    %c768_i32 = arith.constant 768 : i32
    %98 = arith.muli %94, %c768_i32 : i32
    %99 = arith.sitofp %98 : i32 to f32
    %cst_31 = arith.constant 0.000000e+00 : f32
    %100 = vector.broadcast %cst_31 : f32 to vector<6x6x128xf32>
    %101 = arith.select %97, %91, %100 : vector<6x6x128xi1>, vector<6x6x128xf32>
    %102 = vector.shape_cast %101 : vector<6x6x128xf32> to vector<1x6x6x128xf32>
    %cst_32 = arith.constant dense<0.000000e+00> : vector<1xf32>
    %103 = vector.multi_reduction <add>, %102, %cst_32 [1, 2, 3] : vector<1x6x6x128xf32> to vector<1xf32>
    %104 = vector.shape_cast %103 : vector<1xf32> to vector<1x1x1x1xf32>
    %105 = vector.extract %104[0, 0, 0, 0] : f32 from vector<1x1x1x1xf32>
    %106 = arith.divf %105, %99 : f32
    %107 = vector.broadcast %106 : f32 to vector<6x6x128xf32>
    %108 = arith.subf %91, %107 : vector<6x6x128xf32>
    %cst_33 = arith.constant 0.000000e+00 : f32
    %109 = vector.broadcast %cst_33 : f32 to vector<6x6x128xf32>
    %110 = arith.select %97, %108, %109 : vector<6x6x128xi1>, vector<6x6x128xf32>
    %111 = vector.broadcast %105 : f32 to vector<1x1xf32>
    %c0_34 = arith.constant 0 : index
    %c0_35 = arith.constant 0 : index
    %c0_36 = arith.constant 0 : index
    %c0_37 = arith.constant 0 : index
    %112 = vector.load %arg6[%c0_34, %c0_35, %c0_36, %c0_37] : memref<1x1x1x1xf32, #tpu.memory_space<vmem>>, vector<1x1x1x1xf32>
    %113 = vector.shape_cast %112 : vector<1x1x1x1xf32> to vector<1x1xf32>
    %114 = vector.shape_cast %111 : vector<1x1xf32> to vector<1x1x1x1xf32>
    tpu.vector_store %arg6[%c0_34, %c0_35, %c0_36, %c0_37], %114 {strides = array<i32>} : memref<1x1x1x1xf32, #tpu.memory_space<vmem>>, vector<1x1x1x1xf32>,
    %115 = arith.mulf %110, %110 : vector<6x6x128xf32>
    %116 = vector.shape_cast %115 : vector<6x6x128xf32> to vector<1x6x6x128xf32>
    %cst_38 = arith.constant dense<0.000000e+00> : vector<1xf32>
    %117 = vector.multi_reduction <add>, %116, %cst_38 [1, 2, 3] : vector<1x6x6x128xf32> to vector<1xf32>
    %118 = vector.shape_cast %117 : vector<1xf32> to vector<1x1x1x1xf32>
    %119 = vector.extract %118[0, 0, 0, 0] : f32 from vector<1x1x1x1xf32>
    %120 = vector.broadcast %119 : f32 to vector<1x1xf32>
    %c0_39 = arith.constant 0 : index
    %c0_40 = arith.constant 0 : index
    %c0_41 = arith.constant 0 : index
    %c0_42 = arith.constant 0 : index
    %121 = vector.load %arg7[%c0_39, %c0_40, %c0_41, %c0_42] : memref<1x1x1x1xf32, #tpu.memory_space<vmem>>, vector<1x1x1x1xf32>
    %122 = vector.shape_cast %121 : vector<1x1x1x1xf32> to vector<1x1xf32>
    %123 = vector.shape_cast %120 : vector<1x1xf32> to vector<1x1x1x1xf32>
    tpu.vector_store %arg7[%c0_39, %c0_40, %c0_41, %c0_42], %123 {strides = array<i32>} : memref<1x1x1x1xf32, #tpu.memory_space<vmem>>, vector<1x1x1x1xf32>,
    return
  }
  func.func @transform_0(%arg0: i32, %arg1: i32) -> (i32, i32, i32, i32, i32) {
    %c0_i32 = arith.constant 0 : i32
    %c0_i32_0 = arith.constant 0 : i32
    %c0_i32_1 = arith.constant 0 : i32
    %c0_i32_2 = arith.constant 0 : i32
    return %arg0, %arg1, %c0_i32, %c0_i32_0, %c0_i32_1 : i32, i32, i32, i32, i32
  }
  func.func @transform_1(%arg0: i32, %arg1: i32) -> (i32, i32, i32, i32, i32) {
    %c0_i32 = arith.constant 0 : i32
    %c0_i32_0 = arith.constant 0 : i32
    %c0_i32_1 = arith.constant 0 : i32
    %c0_i32_2 = arith.constant 0 : i32
    return %arg0, %arg1, %c0_i32, %c0_i32_0, %c0_i32_1 : i32, i32, i32, i32, i32
  }
  func.func @transform_2(%arg0: i32, %arg1: i32) -> (i32, i32, i32, i32, i32) {
    %c0_i32 = arith.constant 0 : i32
    %c0_i32_0 = arith.constant 0 : i32
    %c0_i32_1 = arith.constant 0 : i32
    %c0_i32_2 = arith.constant 0 : i32
    return %arg0, %arg1, %c0_i32, %c0_i32_0, %c0_i32_1 : i32, i32, i32, i32, i32
  }
  func.func @transform_3(%arg0: i32, %arg1: i32) -> (i32, i32, i32, i32, i32) {
    %c0_i32 = arith.constant 0 : i32
    %c0_i32_0 = arith.constant 0 : i32
    %c0_i32_1 = arith.constant 0 : i32
    %c0_i32_2 = arith.constant 0 : i32
    return %arg0, %arg1, %c0_i32, %c0_i32_0, %c0_i32_1 : i32, i32, i32, i32, i32
  }
  func.func @transform_4(%arg0: i32, %arg1: i32) -> (i32, i32, i32, i32) {
    %c0_i32 = arith.constant 0 : i32
    %c0_i32_0 = arith.constant 0 : i32
    %c0_i32_1 = arith.constant 0 : i32
    return %arg0, %arg1, %c0_i32, %c0_i32_0 : i32, i32, i32, i32
  }
  func.func @transform_5(%arg0: i32, %arg1: i32) -> (i32, i32, i32, i32) {
    %c0_i32 = arith.constant 0 : i32
    %c0_i32_0 = arith.constant 0 : i32
    %c0_i32_1 = arith.constant 0 : i32
    return %arg0, %arg1, %c0_i32, %c0_i32_0 : i32, i32, i32, i32
  }
}

</mosaic_0001>

<llo_original>
// kernel: gmsd_loss.3
$region0: #{gmsd_loss.3}
  #allocation0 [shape = 'u32[]', space=smem, size = 0x4, offset = 0x4, fixed_abs, tag = 'smem constant byte address 0x4 - core index']
  #allocation1 [shape = 'u32[144,128]{1,0:T(1,128)}', space=vmem, size = 0x12000, scoped, tag = 'internal scratch']
  %s0 = inlined_call_operand.vmem [shape: f32[2,1,8,8,128], index: 0, kind: input, shape index: {}]
  %s1 = inlined_call_operand.vmem [shape: f32[2,1,8,8,128], index: 1, kind: input, shape index: {}]
  %s2 = inlined_call_operand.vmem [shape: bf16[2,1,8,8,128], index: 2, kind: input, shape index: {}]
  %s3 = inlined_call_operand.vmem [shape: bf16[2,1,8,8,128], index: 3, kind: input, shape index: {}]
  %s4 = inlined_call_operand.vmem [shape: f32[2,1,1,1], index: 4, kind: output, shape index: {0}]
  %s5 = inlined_call_operand.vmem [shape: f32[2,1,1,1], index: 5, kind: output, shape index: {1}]
  %6 = xla_tuple %s4, %s5
  %s7 = sld [smem:[#allocation0]]
  $region57: #{gmsd_loss.3} parent=0
    _
  %s9 = ssub.s32 1, %s7
  %s10 = scalar_select 0, %s9, %s7
  loop: start=0, step=1, limit=4
  $region2: #{gmsd_loss.3} parent=0 // loop_pre_header
    _
  $region3: #{gmsd_loss.3} parent=0 // loop_header
    %s12 = sphi 0, %s16
    %p13 = scmp.ge.s32.totalorder %s12, 4
    %s19 = sphi 0, %s31
    %s20 = sphi 0, %s27
    %s21 = sphi 0, %s19
    %s22 = sphi 0, %s20
    %s23 = sphi 0, %s21
    %s24 = sphi 0, %s22
    %s36 = sphi 0, %s38
    %s39 = sphi 0, %s36
    %s40 = sphi 0, %s39
    %s56 = sphi 0, %s40
    %s64 = sphi 0, %s66
    %s67 = sphi 0, %s64
    %s68 = sphi 0, %s67
    %s84 = sphi 0, %s68
    %s92 = sphi 0, %s94
    %s95 = sphi 0, %s92
    %s96 = sphi 0, %s95
    %s112 = sphi 0, %s96
    %s120 = sphi 0, %s122
    %s123 = sphi 0, %s120
    %s124 = sphi 0, %s123
    %s140 = sphi 0, %s124
    %s148 = sphi 0, %s150
    %s151 = sphi 0, %s148
    %s152 = sphi 0, %s151
    %s168 = sphi 0, %s152
    %s176 = sphi 0, %s178
    %s179 = sphi 0, %s176
    %s180 = sphi 0, %s179
    %s196 = sphi 0, %s180
  $region4: #{gmsd_loss.3} parent=0 // loop_header_branch
    %15 = sbr.rel (%p13) target = $region8
  $region5: #{gmsd_loss.3} parent=0 // loop_body
    %s17 = ssub.s32 %s12, 1
    %s18 = ssub.s32 %s12, 2
    %s25 = sadd.s32 1, %s20
    %p26 = scmp.ge.s32.totalorder %s25, 1
    %s27 = scalar_select %p26, 0, %s25
    %s28 = sadd.s32 1, %s19
    %s29 = scalar_select %p26, %s28, %s19
    %p30 = scmp.ge.s32.totalorder %s29, 2
    %s31 = scalar_select %p30, 0, %s29
    %s32 = ssub.s32 %s19, %s31
    %s33 = ssub.s32 %s20, %s27
    %s34 = sor.u32 %s32, %s33
    %p35 = scmp.eq.s32.totalorder %s34, 0
    %s37 = sadd.s32 %s36, 1
    %s38 = scalar_select %p35, %s36, %s37
    %p41 = pneg %p35
    %p42 = scmp.eq.s32.totalorder %s12, 1
    %p43 = por %p41, %p42
    %p44 = scmp.ne.s32.totalorder %s36, %s39
    %p45 = scmp.eq.s32.totalorder %s12, 0
    %p46 = por %p44, %p45
    %p47 = scmp.ne.s32.totalorder %s36, %s39
    %p48 = scmp.eq.s32.totalorder %s17, 1
    %p49 = por %p47, %p48
    %p50 = scmp.ne.s32.totalorder %s39, %s40
    %p51 = scmp.eq.s32.totalorder %s17, 0
    %p52 = por %p50, %p51
    %p53 = scmp.ne.s32.totalorder %s39, %s40
    %p54 = scmp.eq.s32.totalorder %s18, 1
    %p55 = por %p53, %p54
    %p57 = scmp.ne.s32.totalorder %s40, %s56
    %p58 = scmp.eq.s32.totalorder %s18, 0
    %p59 = por %p57, %p58
    %s60 = ssub.s32 %s19, %s31
    %s61 = ssub.s32 %s20, %s27
    %s62 = sor.u32 %s60, %s61
    %p63 = scmp.eq.s32.totalorder %s62, 0
    %s65 = sadd.s32 %s64, 1
    %s66 = scalar_select %p63, %s64, %s65
    %p69 = pneg %p63
    %p70 = scmp.eq.s32.totalorder %s12, 1
    %p71 = por %p69, %p70
    %p72 = scmp.ne.s32.totalorder %s64, %s67
    %p73 = scmp.eq.s32.totalorder %s12, 0
    %p74 = por %p72, %p73
    %p75 = scmp.ne.s32.totalorder %s64, %s67
    %p76 = scmp.eq.s32.totalorder %s17, 1
    %p77 = por %p75, %p76
    %p78 = scmp.ne.s32.totalorder %s67, %s68
    %p79 = scmp.eq.s32.totalorder %s17, 0
    %p80 = por %p78, %p79
    %p81 = scmp.ne.s32.totalorder %s67, %s68
    %p82 = scmp.eq.s32.totalorder %s18, 1
    %p83 = por %p81, %p82
    %p85 = scmp.ne.s32.totalorder %s68, %s84
    %p86 = scmp.eq.s32.totalorder %s18, 0
    %p87 = por %p85, %p86
    %s88 = ssub.s32 %s19, %s31
    %s89 = ssub.s32 %s20, %s27
    %s90 = sor.u32 %s88, %s89
    %p91 = scmp.eq.s32.totalorder %s90, 0
    %s93 = sadd.s32 %s92, 1
    %s94 = scalar_select %p91, %s92, %s93
    %p97 = pneg %p91
    %p98 = scmp.eq.s32.totalorder %s12, 1
    %p99 = por %p97, %p98
    %p100 = scmp.ne.s32.totalorder %s92, %s95
    %p101 = scmp.eq.s32.totalorder %s12, 0
    %p102 = por %p100, %p101
    %p103 = scmp.ne.s32.totalorder %s92, %s95
    %p104 = scmp.eq.s32.totalorder %s17, 1
    %p105 = por %p103, %p104
    %p106 = scmp.ne.s32.totalorder %s95, %s96
    %p107 = scmp.eq.s32.totalorder %s17, 0
    %p108 = por %p106, %p107
    %p109 = scmp.ne.s32.totalorder %s95, %s96
    %p110 = scmp.eq.s32.totalorder %s18, 1
    %p111 = por %p109, %p110
    %p113 = scmp.ne.s32.totalorder %s96, %s112
    %p114 = scmp.eq.s32.totalorder %s18, 0
    %p115 = por %p113, %p114
    %s116 = ssub.s32 %s19, %s31
    %s117 = ssub.s32 %s20, %s27
    %s118 = sor.u32 %s116, %s117
    %p119 = scmp.eq.s32.totalorder %s118, 0
    %s121 = sadd.s32 %s120, 1
    %s122 = scalar_select %p119, %s120, %s121
    %p125 = pneg %p119
    %p126 = scmp.eq.s32.totalorder %s12, 1
    %p127 = por %p125, %p126
    %p128 = scmp.ne.s32.totalorder %s120, %s123
    %p129 = scmp.eq.s32.totalorder %s12, 0
    %p130 = por %p128, %p129
    %p131 = scmp.ne.s32.totalorder %s120, %s123
    %p132 = scmp.eq.s32.totalorder %s17, 1
    %p133 = por %p131, %p132
    %p134 = scmp.ne.s32.totalorder %s123, %s124
    %p135 = scmp.eq.s32.totalorder %s17, 0
    %p136 = por %p134, %p135
    %p137 = scmp.ne.s32.totalorder %s123, %s124
    %p138 = scmp.eq.s32.totalorder %s18, 1
    %p139 = por %p137, %p138
    %p141 = scmp.ne.s32.totalorder %s124, %s140
    %p142 = scmp.eq.s32.totalorder %s18, 0
    %p143 = por %p141, %p142
    %s144 = ssub.s32 %s19, %s31
    %s145 = ssub.s32 %s20, %s27
    %s146 = sor.u32 %s144, %s145
    %p147 = scmp.eq.s32.totalorder %s146, 0
    %s149 = sadd.s32 %s148, 1
    %s150 = scalar_select %p147, %s148, %s149
    %p153 = pneg %p147
    %p154 = scmp.eq.s32.totalorder %s12, 1
    %p155 = por %p153, %p154
    %p156 = scmp.ne.s32.totalorder %s148, %s151
    %p157 = scmp.eq.s32.totalorder %s12, 0
    %p158 = por %p156, %p157
    %p159 = scmp.ne.s32.totalorder %s148, %s151
    %p160 = scmp.eq.s32.totalorder %s17, 1
    %p161 = por %p159, %p160
    %p162 = scmp.ne.s32.totalorder %s151, %s152
    %p163 = scmp.eq.s32.totalorder %s17, 0
    %p164 = por %p162, %p163
    %p165 = scmp.ne.s32.totalorder %s151, %s152
    %p166 = scmp.eq.s32.totalorder %s18, 1
    %p167 = por %p165, %p166
    %p169 = scmp.ne.s32.totalorder %s152, %s168
    %p170 = scmp.eq.s32.totalorder %s18, 0
    %p171 = por %p169, %p170
    %s172 = ssub.s32 %s19, %s31
    %s173 = ssub.s32 %s20, %s27
    %s174 = sor.u32 %s172, %s173
    %p175 = scmp.eq.s32.totalorder %s174, 0
    %s177 = sadd.s32 %s176, 1
    %s178 = scalar_select %p175, %s176, %s177
    %p181 = pneg %p175
    %p182 = scmp.eq.s32.totalorder %s12, 1
    %p183 = por %p181, %p182
    %p184 = scmp.ne.s32.totalorder %s176, %s179
    %p185 = scmp.eq.s32.totalorder %s12, 0
    %p186 = por %p184, %p185
    %p187 = scmp.ne.s32.totalorder %s176, %s179
    %p188 = scmp.eq.s32.totalorder %s17, 1
    %p189 = por %p187, %p188
    %p190 = scmp.ne.s32.totalorder %s179, %s180
    %p191 = scmp.eq.s32.totalorder %s17, 0
    %p192 = por %p190, %p191
    %p193 = scmp.ne.s32.totalorder %s179, %s180
    %p194 = scmp.eq.s32.totalorder %s18, 1
    %p195 = por %p193, %p194
    %p197 = scmp.ne.s32.totalorder %s180, %s196
    %p198 = scmp.eq.s32.totalorder %s18, 0
    %p199 = por %p197, %p198
    %p200 = scmp.le.s32.totalorder 1, %s12
    %p201 = scmp.lt.s32.totalorder %s12, 3
    %p202 = pnand %p200, %p201
    %p203 = pneg %p202
    // Predicated region
    $region9: #{gmsd_loss.3} parent=5 // pred_check
      _
    $region10: #{gmsd_loss.3} parent=5 // pred_check_branch
      %205 = sbr.rel (%p202) target = $region12
    $region11: #{gmsd_loss.3} parent=5 // pred_region
      %s206 = ssub.s32 %s12, 1
    $region12: #{gmsd_loss.3} parent=5 // pred_fallthru
      _
    %p207 = scmp.lt.s32.totalorder %s12, 2
    // Predicated region
    $region13: #{gmsd_loss.3} parent=5 // pred_check
      %p208 = pneg %p207
    $region14: #{gmsd_loss.3} parent=5 // pred_check_branch
      %210 = sbr.rel (%p208) target = $region16
    $region15: #{gmsd_loss.3} parent=5 // pred_region
      // Predicated region
      $region17: #{gmsd_loss.3} parent=15 // pred_check
        %p211 = pneg %p46
      $region18: #{gmsd_loss.3} parent=15 // pred_check_branch
        %213 = sbr.rel (%p211) target = $region20
      $region19: #{gmsd_loss.3} parent=15 // pred_region
        %p214 = scmp.lt.s32.totalorder %s19, 1
        %s215 = scalar_select %p214, %s19, 1
        %p216 = scmp.lt.s32.totalorder %s20, 0
        %s217 = scalar_select %p216, %s20, 0
        %s218 = smul.addr %s217, 8
        %s219 = smul.addr %s215, 8
        %s220 = sadd.s32 %s218, %s219
        %s221 = smul.addr %s220, 8
        %s222 = scalar_lea.vmem %s0, %s221
      $region20: #{gmsd_loss.3} parent=15 // pred_fallthru
        _
      // Predicated region
      $region21: #{gmsd_loss.3} parent=15 // pred_check
        %p223 = pneg %p74
      $region22: #{gmsd_loss.3} parent=15 // pred_check_branch
        %225 = sbr.rel (%p223) target = $region24
      $region23: #{gmsd_loss.3} parent=15 // pred_region
        %p226 = scmp.lt.s32.totalorder %s19, 1
        %s227 = scalar_select %p226, %s19, 1
        %p228 = scmp.lt.s32.totalorder %s20, 0
        %s229 = scalar_select %p228, %s20, 0
        %s230 = smul.addr %s229, 8
        %s231 = smul.addr %s227, 8
        %s232 = sadd.s32 %s230, %s231
        %s233 = smul.addr %s232, 8
        %s234 = scalar_lea.vmem %s1, %s233
      $region24: #{gmsd_loss.3} parent=15 // pred_fallthru
        _
      // Predicated region
      $region25: #{gmsd_loss.3} parent=15 // pred_check
        %p235 = pneg %p102
      $region26: #{gmsd_loss.3} parent=15 // pred_check_branch
        %237 = sbr.rel (%p235) target = $region28
      $region27: #{gmsd_loss.3} parent=15 // pred_region
        %p238 = scmp.lt.s32.totalorder %s19, 1
        %s239 = scalar_select %p238, %s19, 1
        %p240 = scmp.lt.s32.totalorder %s20, 0
        %s241 = scalar_select %p240, %s20, 0
        %s242 = smul.addr %s241, 8
        %s243 = smul.addr %s239, 8
        %s244 = sadd.s32 %s242, %s243
        %s245 = smul.addr %s244, 4
        %s246 = scalar_lea.vmem %s2, %s245
      $region28: #{gmsd_loss.3} parent=15 // pred_fallthru
        _
      // Predicated region
      $region29: #{gmsd_loss.3} parent=15 // pred_check
        %p247 = pneg %p130
      $region30: #{gmsd_loss.3} parent=15 // pred_check_branch
        %249 = sbr.rel (%p247) target = $region32
      $region31: #{gmsd_loss.3} parent=15 // pred_region
        %p250 = scmp.lt.s32.totalorder %s19, 1
        %s251 = scalar_select %p250, %s19, 1
        %p252 = scmp.lt.s32.totalorder %s20, 0
        %s253 = scalar_select %p252, %s20, 0
        %s254 = smul.addr %s253, 8
        %s255 = smul.addr %s251, 8
        %s256 = sadd.s32 %s254, %s255
        %s257 = smul.addr %s256, 4
        %s258 = scalar_lea.vmem %s3, %s257
      $region32: #{gmsd_loss.3} parent=15 // pred_fallthru
        _
    $region16: #{gmsd_loss.3} parent=5 // pred_fallthru
      _
    %p259 = scmp.le.s32.totalorder 1, %s12
    %p260 = scmp.lt.s32.totalorder %s12, 3
    %p261 = pnand %p259, %p260
    %p262 = pneg %p261
    // Predicated region
    $region33: #{gmsd_loss.3} parent=5 // pred_check
      _
    $region34: #{gmsd_loss.3} parent=5 // pred_check_branch
      %264 = sbr.rel (%p261) target = $region36
    $region35: #{gmsd_loss.3} parent=5 // pred_region
      %s265 = ssub.s32 %s12, 1
      %p266 = scmp.lt.s32.totalorder %s21, 1
      %s267 = scalar_select %p266, %s21, 1
      %p268 = scmp.lt.s32.totalorder %s22, 0
      %s269 = scalar_select %p268, %s22, 0
      %s270 = smul.addr %s269, 8
      %s271 = smul.addr %s267, 8
      %s272 = sadd.s32 %s270, %s271
      %s273 = smul.addr %s272, 8
      %s274 = scalar_lea.vmem %s0, %s273
      %p275 = pneg %p52
      %p276 = pneg %p49
      %p277 = scmp.lt.s32.totalorder %s21, 1
      %s278 = scalar_select %p277, %s21, 1
      %p279 = scmp.lt.s32.totalorder %s22, 0
      %s280 = scalar_select %p279, %s22, 0
      %s281 = smul.addr %s280, 8
      %s282 = smul.addr %s278, 8
      %s283 = sadd.s32 %s281, %s282
      %s284 = smul.addr %s283, 8
      %s285 = scalar_lea.vmem %s1, %s284
      %p286 = pneg %p80
      %p287 = pneg %p77
      %p288 = scmp.lt.s32.totalorder %s21, 1
      %s289 = scalar_select %p288, %s21, 1
      %p290 = scmp.lt.s32.totalorder %s22, 0
      %s291 = scalar_select %p290, %s22, 0
      %s292 = smul.addr %s291, 8
      %s293 = smul.addr %s289, 8
      %s294 = sadd.s32 %s292, %s293
      %s295 = smul.addr %s294, 4
      %s296 = scalar_lea.vmem %s2, %s295
      %p297 = pneg %p108
      %p298 = pneg %p105
      %p299 = scmp.lt.s32.totalorder %s21, 1
      %s300 = scalar_select %p299, %s21, 1
      %p301 = scmp.lt.s32.totalorder %s22, 0
      %s302 = scalar_select %p301, %s22, 0
      %s303 = smul.addr %s302, 8
      %s304 = smul.addr %s300, 8
      %s305 = sadd.s32 %s303, %s304
      %s306 = smul.addr %s305, 4
      %s307 = scalar_lea.vmem %s3, %s306
      %p308 = pneg %p136
      %p309 = pneg %p133
      %p310 = pneg %p164
      %p311 = pneg %p161
      %p312 = scmp.lt.s32.totalorder %s21, 1
      %s313 = scalar_select %p312, %s21, 1
      %p314 = scmp.lt.s32.totalorder %s22, 0
      %s315 = scalar_select %p314, %s22, 0
      %s316 = sadd.s32 %s315, %s313
      %s317 = scalar_lea.vmem %s4, %s316
      %p318 = pneg %p192
      %p319 = pneg %p189
      %p320 = scmp.lt.s32.totalorder %s21, 1
      %s321 = scalar_select %p320, %s21, 1
      %p322 = scmp.lt.s32.totalorder %s22, 0
      %s323 = scalar_select %p322, %s22, 0
      %s324 = sadd.s32 %s323, %s321
      %s325 = scalar_lea.vmem %s5, %s324
      %p326 = scmp.lt.s32.totalorder %s21, 1
      %s327 = scalar_select %p326, %s21, 1
      %p328 = scmp.lt.s32.totalorder %s22, 0
      %s329 = scalar_select %p328, %s22, 0
      %s330 = smul.addr %s329, 8
      %s331 = smul.addr %s327, 8
      %s332 = sadd.s32 %s330, %s331
      %s333 = smul.addr %s332, 8
      %s334 = scalar_lea.vmem %s0, %s333
      %p335 = scmp.lt.s32.totalorder %s21, 1
      %s336 = scalar_select %p335, %s21, 1
      %p337 = scmp.lt.s32.totalorder %s22, 0
      %s338 = scalar_select %p337, %s22, 0
      %s339 = smul.addr %s338, 8
      %s340 = smul.addr %s336, 8
      %s341 = sadd.s32 %s339, %s340
      %s342 = smul.addr %s341, 8
      %s343 = scalar_lea.vmem %s1, %s342
      %p344 = scmp.lt.s32.totalorder %s21, 1
      %s345 = scalar_select %p344, %s21, 1
      %p346 = scmp.lt.s32.totalorder %s22, 0
      %s347 = scalar_select %p346, %s22, 0
      %s348 = smul.addr %s347, 8
      %s349 = smul.addr %s345, 8
      %s350 = sadd.s32 %s348, %s349
      %s351 = smul.addr %s350, 4
      %s352 = scalar_lea.vmem %s2, %s351
      %p353 = scmp.lt.s32.totalorder %s21, 1
      %s354 = scalar_select %p353, %s21, 1
      %p355 = scmp.lt.s32.totalorder %s22, 0
      %s356 = scalar_select %p355, %s22, 0
      %s357 = smul.addr %s356, 8
      %s358 = smul.addr %s354, 8
      %s359 = sadd.s32 %s357, %s358
      %s360 = smul.addr %s359, 4
      %s361 = scalar_lea.vmem %s3, %s360
      %p362 = scmp.lt.s32.totalorder %s21, 1
      %s363 = scalar_select %p362, %s21, 1
      %p364 = scmp.lt.s32.totalorder %s22, 0
      %s365 = scalar_select %p364, %s22, 0
      %s366 = sadd.s32 %s365, %s363
      %s367 = scalar_lea.vmem %s4, %s366
      %p368 = scmp.lt.s32.totalorder %s21, 1
      %s369 = scalar_select %p368, %s21, 1
      %p370 = scmp.lt.s32.totalorder %s22, 0
      %s371 = scalar_select %p370, %s22, 0
      %s372 = sadd.s32 %s371, %s369
      %s373 = scalar_lea.vmem %s5, %s372
      %v374 = vld [vmem:[%s334] sm:$0xff]
      %v375 = vld [vmem:[%s334 + $0x8] sm:$0xff]
      %v376 = vld [vmem:[%s334 + $0x10] sm:$0xff]
      %v377 = vld [vmem:[%s334 + $0x18] sm:$0xff]
      %v378 = vld [vmem:[%s334 + $0x20] sm:$0xff]
      %v379 = vld [vmem:[%s334 + $0x28] sm:$0xff]
      %v380 = vld [vmem:[%s334 + $0x30] sm:$0xff]
      %v381 = vld [vmem:[%s334 + $0x38] sm:$0xff]
      %v382 = vmul.f32 %v374, %v374
      %v383 = vmul.f32 %v375, %v375
      %v384 = vmul.f32 %v376, %v376
      %v385 = vmul.f32 %v377, %v377
      %v386 = vmul.f32 %v378, %v378
      %v387 = vmul.f32 %v379, %v379
      %v388 = vmul.f32 %v380, %v380
      %v389 = vmul.f32 %v381, %v381
      %390 = vadd.xlane.f32.xlu0 %v382
      %v391 = vpop.xlane.xlu0 %390
      %392 = vadd.xlane.f32.xlu0 %v383
      %v393 = vpop.xlane.xlu0 %392
      %394 = vadd.xlane.f32.xlu0 %v384
      %v395 = vpop.xlane.xlu0 %394
      %396 = vadd.xlane.f32.xlu0 %v385
      %v397 = vpop.xlane.xlu0 %396
      %398 = vadd.xlane.f32.xlu0 %v386
      %v399 = vpop.xlane.xlu0 %398
      %400 = vadd.xlane.f32.xlu0 %v387
      %v401 = vpop.xlane.xlu0 %400
      %402 = vadd.xlane.f32.xlu0 %v388
      %v403 = vpop.xlane.xlu0 %402
      %404 = vadd.xlane.f32.xlu0 %v389
      %v405 = vpop.xlane.xlu0 %404
      %v406 = vrsqrt.pop %v391
      %v407 = vrsqrt.pop %v393
      %v408 = vrsqrt.pop %v395
      %v409 = vrsqrt.pop %v397
      %v410 = vrsqrt.pop %v399
      %v411 = vrsqrt.pop %v401
      %v412 = vrsqrt.pop %v403
      %v413 = vrsqrt.pop %v405
      %v414 = vmul.f32 %v374, %v406
      %v415 = vmul.f32 %v375, %v407
      %v416 = vmul.f32 %v376, %v408
      %v417 = vmul.f32 %v377, %v409
      %v418 = vmul.f32 %v378, %v410
      %v419 = vmul.f32 %v379, %v411
      %v420 = vmul.f32 %v380, %v412
      %v421 = vmul.f32 %v381, %v413
      %v422 = vld [vmem:[%s352] sm:$0xf]
      %v423 = vld [vmem:[%s352 + $0x4] sm:$0xf]
      %v424 = vld [vmem:[%s352 + $0x8] sm:$0xf]
      %v425 = vld [vmem:[%s352 + $0xc] sm:$0xf]
      %v426 = vld [vmem:[%s352 + $0x10] sm:$0xf]
      %v427 = vld [vmem:[%s352 + $0x14] sm:$0xf]
      %v428 = vld [vmem:[%s352 + $0x18] sm:$0xf]
      %v429 = vld [vmem:[%s352 + $0x1c] sm:$0xf]
      %v430 = vunpack.c.l.bf16 %v422
      %v431 = vunpack.c.l.bf16 %v423
      %v432 = vunpack.c.l.bf16 %v424
      %v433 = vunpack.c.l.bf16 %v425
      %v434 = vunpack.c.l.bf16 %v426
      %v435 = vunpack.c.l.bf16 %v427
      %v436 = vunpack.c.l.bf16 %v428
      %v437 = vunpack.c.l.bf16 %v429
      %v438 = vmul.f32 %v430, 0.01
      %v439 = vmul.f32 %v431, 0.01
      %v440 = vmul.f32 %v432, 0.01
      %v441 = vmul.f32 %v433, 0.01
      %v442 = vmul.f32 %v434, 0.01
      %v443 = vmul.f32 %v435, 0.01
      %v444 = vmul.f32 %v436, 0.01
      %v445 = vmul.f32 %v437, 0.01
      %v446 = vadd.f32 %v414, %v438
      %v447 = vadd.f32 %v415, %v439
      %v448 = vadd.f32 %v416, %v440
      %v449 = vadd.f32 %v417, %v441
      %v450 = vadd.f32 %v418, %v442
      %v451 = vadd.f32 %v419, %v443
      %v452 = vadd.f32 %v420, %v444
      %v453 = vadd.f32 %v421, %v445
      %v454 = vmul.f32 %v446, %v446
      %v455 = vmul.f32 %v447, %v447
      %v456 = vmul.f32 %v448, %v448
      %v457 = vmul.f32 %v449, %v449
      %v458 = vmul.f32 %v450, %v450
      %v459 = vmul.f32 %v451, %v451
      %v460 = vmul.f32 %v452, %v452
      %v461 = vmul.f32 %v453, %v453
      %462 = vadd.xlane.f32.xlu0 %v454
      %v463 = vpop.xlane.xlu0 %462
      %464 = vadd.xlane.f32.xlu0 %v455
      %v465 = vpop.xlane.xlu0 %464
      %466 = vadd.xlane.f32.xlu0 %v456
      %v467 = vpop.xlane.xlu0 %466
      %468 = vadd.xlane.f32.xlu0 %v457
      %v469 = vpop.xlane.xlu0 %468
      %470 = vadd.xlane.f32.xlu0 %v458
      %v471 = vpop.xlane.xlu0 %470
      %472 = vadd.xlane.f32.xlu0 %v459
      %v473 = vpop.xlane.xlu0 %472
      %474 = vadd.xlane.f32.xlu0 %v460
      %v475 = vpop.xlane.xlu0 %474
      %476 = vadd.xlane.f32.xlu0 %v461
      %v477 = vpop.xlane.xlu0 %476
      %v478 = vrsqrt.pop %v463
      %v479 = vrsqrt.pop %v465
      %v480 = vrsqrt.pop %v467
      %v481 = vrsqrt.pop %v469
      %v482 = vrsqrt.pop %v471
      %v483 = vrsqrt.pop %v473
      %v484 = vrsqrt.pop %v475
      %v485 = vrsqrt.pop %v477
      %v486 = vmul.f32 %v446, %v478
      %v487 = vmul.f32 %v447, %v479
      %v488 = vmul.f32 %v448, %v480
      %v489 = vmul.f32 %v449, %v481
      %v490 = vmul.f32 %v450, %v482
      %v491 = vmul.f32 %v451, %v483
      %v492 = vmul.f32 %v452, %v484
      %v493 = vmul.f32 %v453, %v485
      %v502 = vrot.slane %v486, 2
      %v503 = vrot.slane %v487, 2
      %v504 = vrot.slane %v488, 2
      %v505 = vrot.slane %v489, 2
      %v506 = vrot.slane %v490, 2
      %v507 = vrot.slane %v491, 2
      %v508 = vrot.slane %v492, 2
      %v509 = vrot.slane %v493, 2
      %v518 = vsub.f32 %v486, %v502
      %v519 = vsub.f32 %v487, %v503
      %v520 = vsub.f32 %v488, %v504
      %v521 = vsub.f32 %v489, %v505
      %v522 = vsub.f32 %v490, %v506
      %v523 = vsub.f32 %v491, %v507
      %v524 = vsub.f32 %v492, %v508
      %v525 = vsub.f32 %v493, %v509
      %v526 = vadd.f32 %v518, %v519
      %v527 = vadd.f32 %v519, %v520
      %v528 = vadd.f32 %v520, %v521
      %v529 = vadd.f32 %v521, %v522
      %v530 = vadd.f32 %v522, %v523
      %v531 = vadd.f32 %v523, %v524
      %v532 = vadd.f32 %v526, %v520
      %v533 = vadd.f32 %v527, %v521
      %v534 = vadd.f32 %v528, %v522
      %v535 = vadd.f32 %v529, %v523
      %v536 = vadd.f32 %v530, %v524
      %v537 = vadd.f32 %v531, %v525
      %v538 = vsub.f32 %v486, %v488
      %v539 = vsub.f32 %v487, %v489
      %v540 = vsub.f32 %v488, %v490
      %v541 = vsub.f32 %v489, %v491
      %v542 = vsub.f32 %v490, %v492
      %v543 = vsub.f32 %v491, %v493
      %v550 = vrot.slane %v538, 1
      %v551 = vrot.slane %v539, 1
      %v552 = vrot.slane %v540, 1
      %v553 = vrot.slane %v541, 1
      %v554 = vrot.slane %v542, 1
      %v555 = vrot.slane %v543, 1
      %v562 = vadd.f32 %v538, %v550
      %v563 = vadd.f32 %v539, %v551
      %v564 = vadd.f32 %v540, %v552
      %v565 = vadd.f32 %v541, %v553
      %v566 = vadd.f32 %v542, %v554
      %v567 = vadd.f32 %v543, %v555
      %v568 = vrot.slane %v538, 2
      %v569 = vrot.slane %v539, 2
      %v570 = vrot.slane %v540, 2
      %v571 = vrot.slane %v541, 2
      %v572 = vrot.slane %v542, 2
      %v573 = vrot.slane %v543, 2
      %v580 = vadd.f32 %v562, %v568
      %v581 = vadd.f32 %v563, %v569
      %v582 = vadd.f32 %v564, %v570
      %v583 = vadd.f32 %v565, %v571
      %v584 = vadd.f32 %v566, %v572
      %v585 = vadd.f32 %v567, %v573
      %v586 = vmul.f32 %v532, %v532
      %v587 = vmul.f32 %v533, %v533
      %v588 = vmul.f32 %v534, %v534
      %v589 = vmul.f32 %v535, %v535
      %v590 = vmul.f32 %v536, %v536
      %v591 = vmul.f32 %v537, %v537
      %v592 = vmul.f32 %v580, %v580
      %v593 = vmul.f32 %v581, %v581
      %v594 = vmul.f32 %v582, %v582
      %v595 = vmul.f32 %v583, %v583
      %v596 = vmul.f32 %v584, %v584
      %v597 = vmul.f32 %v585, %v585
      %v598 = vadd.f32 %v586, %v592
      %v599 = vadd.f32 %v587, %v593
      %v600 = vadd.f32 %v588, %v594
      %v601 = vadd.f32 %v589, %v595
      %v602 = vadd.f32 %v590, %v596
      %v603 = vadd.f32 %v591, %v597
      %v604 = vmul.f32 %v598, 0.11111111
      %v605 = vmul.f32 %v599, 0.11111111
      %v606 = vmul.f32 %v600, 0.11111111
      %v607 = vmul.f32 %v601, 0.11111111
      %v608 = vmul.f32 %v602, 0.11111111
      %v609 = vmul.f32 %v603, 0.11111111
      %v610 = vld [vmem:[%s343] sm:$0xff]
      %v611 = vld [vmem:[%s343 + $0x8] sm:$0xff]
      %v612 = vld [vmem:[%s343 + $0x10] sm:$0xff]
      %v613 = vld [vmem:[%s343 + $0x18] sm:$0xff]
      %v614 = vld [vmem:[%s343 + $0x20] sm:$0xff]
      %v615 = vld [vmem:[%s343 + $0x28] sm:$0xff]
      %v616 = vld [vmem:[%s343 + $0x30] sm:$0xff]
      %v617 = vld [vmem:[%s343 + $0x38] sm:$0xff]
      %v618 = vmul.f32 %v610, %v610
      %v619 = vmul.f32 %v611, %v611
      %v620 = vmul.f32 %v612, %v612
      %v621 = vmul.f32 %v613, %v613
      %v622 = vmul.f32 %v614, %v614
      %v623 = vmul.f32 %v615, %v615
      %v624 = vmul.f32 %v616, %v616
      %v625 = vmul.f32 %v617, %v617
      %626 = vadd.xlane.f32.xlu0 %v618
      %v627 = vpop.xlane.xlu0 %626
      %628 = vadd.xlane.f32.xlu0 %v619
      %v629 = vpop.xlane.xlu0 %628
      %630 = vadd.xlane.f32.xlu0 %v620
      %v631 = vpop.xlane.xlu0 %630
      %632 = vadd.xlane.f32.xlu0 %v621
      %v633 = vpop.xlane.xlu0 %632
      %634 = vadd.xlane.f32.xlu0 %v622
      %v635 = vpop.xlane.xlu0 %634
      %636 = vadd.xlane.f32.xlu0 %v623
      %v637 = vpop.xlane.xlu0 %636
      %638 = vadd.xlane.f32.xlu0 %v624
      %v639 = vpop.xlane.xlu0 %638
      %640 = vadd.xlane.f32.xlu0 %v625
      %v641 = vpop.xlane.xlu0 %640
      %v642 = vrsqrt.pop %v627
      %v643 = vrsqrt.pop %v629
      %v644 = vrsqrt.pop %v631
      %v645 = vrsqrt.pop %v633
      %v646 = vrsqrt.pop %v635
      %v647 = vrsqrt.pop %v637
      %v648 = vrsqrt.pop %v639
      %v649 = vrsqrt.pop %v641
      %v650 = vmul.f32 %v610, %v642
      %v651 = vmul.f32 %v611, %v643
      %v652 = vmul.f32 %v612, %v644
      %v653 = vmul.f32 %v613, %v645
      %v654 = vmul.f32 %v614, %v646
      %v655 = vmul.f32 %v615, %v647
      %v656 = vmul.f32 %v616, %v648
      %v657 = vmul.f32 %v617, %v649
      %v658 = vld [vmem:[%s361] sm:$0xf]
      %v659 = vld [vmem:[%s361 + $0x4] sm:$0xf]
      %v660 = vld [vmem:[%s361 + $0x8] sm:$0xf]
      %v661 = vld [vmem:[%s361 + $0xc] sm:$0xf]
      %v662 = vld [vmem:[%s361 + $0x10] sm:$0xf]
      %v663 = vld [vmem:[%s361 + $0x14] sm:$0xf]
      %v664 = vld [vmem:[%s361 + $0x18] sm:$0xf]
      %v665 = vld [vmem:[%s361 + $0x1c] sm:$0xf]
      %v666 = vunpack.c.l.bf16 %v658
      %v667 = vunpack.c.l.bf16 %v659
      %v668 = vunpack.c.l.bf16 %v660
      %v669 = vunpack.c.l.bf16 %v661
      %v670 = vunpack.c.l.bf16 %v662
      %v671 = vunpack.c.l.bf16 %v663
      %v672 = vunpack.c.l.bf16 %v664
      %v673 = vunpack.c.l.bf16 %v665
      %v674 = vmul.f32 %v666, 0.01
      %v675 = vmul.f32 %v667, 0.01
      %v676 = vmul.f32 %v668, 0.01
      %v677 = vmul.f32 %v669, 0.01
      %v678 = vmul.f32 %v670, 0.01
      %v679 = vmul.f32 %v671, 0.01
      %v680 = vmul.f32 %v672, 0.01
      %v681 = vmul.f32 %v673, 0.01
      %v682 = vadd.f32 %v650, %v674
      %v683 = vadd.f32 %v651, %v675
      %v684 = vadd.f32 %v652, %v676
      %v685 = vadd.f32 %v653, %v677
      %v686 = vadd.f32 %v654, %v678
      %v687 = vadd.f32 %v655, %v679
      %v688 = vadd.f32 %v656, %v680
      %v689 = vadd.f32 %v657, %v681
      %v690 = vmul.f32 %v682, %v682
      %v691 = vmul.f32 %v683, %v683
      %v692 = vmul.f32 %v684, %v684
      %v693 = vmul.f32 %v685, %v685
      %v694 = vmul.f32 %v686, %v686
      %v695 = vmul.f32 %v687, %v687
      %v696 = vmul.f32 %v688, %v688
      %v697 = vmul.f32 %v689, %v689
      %698 = vadd.xlane.f32.xlu0 %v690
      %v699 = vpop.xlane.xlu0 %698
      %700 = vadd.xlane.f32.xlu0 %v691
      %v701 = vpop.xlane.xlu0 %700
      %702 = vadd.xlane.f32.xlu0 %v692
      %v703 = vpop.xlane.xlu0 %702
      %704 = vadd.xlane.f32.xlu0 %v693
      %v705 = vpop.xlane.xlu0 %704
      %706 = vadd.xlane.f32.xlu0 %v694
      %v707 = vpop.xlane.xlu0 %706
      %708 = vadd.xlane.f32.xlu0 %v695
      %v709 = vpop.xlane.xlu0 %708
      %710 = vadd.xlane.f32.xlu0 %v696
      %v711 = vpop.xlane.xlu0 %710
      %712 = vadd.xlane.f32.xlu0 %v697
      %v713 = vpop.xlane.xlu0 %712
      %v714 = vrsqrt.pop %v699
      %v715 = vrsqrt.pop %v701
      %v716 = vrsqrt.pop %v703
      %v717 = vrsqrt.pop %v705
      %v718 = vrsqrt.pop %v707
      %v719 = vrsqrt.pop %v709
      %v720 = vrsqrt.pop %v711
      %v721 = vrsqrt.pop %v713
      %v722 = vmul.f32 %v682, %v714
      %v723 = vmul.f32 %v683, %v715
      %v724 = vmul.f32 %v684, %v716
      %v725 = vmul.f32 %v685, %v717
      %v726 = vmul.f32 %v686, %v718
      %v727 = vmul.f32 %v687, %v719
      %v728 = vmul.f32 %v688, %v720
      %v729 = vmul.f32 %v689, %v721
      %v738 = vrot.slane %v722, 2
      %v739 = vrot.slane %v723, 2
      %v740 = vrot.slane %v724, 2
      %v741 = vrot.slane %v725, 2
      %v742 = vrot.slane %v726, 2
      %v743 = vrot.slane %v727, 2
      %v744 = vrot.slane %v728, 2
      %v745 = vrot.slane %v729, 2
      %v754 = vsub.f32 %v722, %v738
      %v755 = vsub.f32 %v723, %v739
      %v756 = vsub.f32 %v724, %v740
      %v757 = vsub.f32 %v725, %v741
      %v758 = vsub.f32 %v726, %v742
      %v759 = vsub.f32 %v727, %v743
      %v760 = vsub.f32 %v728, %v744
      %v761 = vsub.f32 %v729, %v745
      %v762 = vadd.f32 %v754, %v755
      %v763 = vadd.f32 %v755, %v756
      %v764 = vadd.f32 %v756, %v757
      %v765 = vadd.f32 %v757, %v758
      %v766 = vadd.f32 %v758, %v759
      %v767 = vadd.f32 %v759, %v760
      %v768 = vadd.f32 %v762, %v756
      %v769 = vadd.f32 %v763, %v757
      %v770 = vadd.f32 %v764, %v758
      %v771 = vadd.f32 %v765, %v759
      %v772 = vadd.f32 %v766, %v760
      %v773 = vadd.f32 %v767, %v761
      %v774 = vsub.f32 %v722, %v724
      %v775 = vsub.f32 %v723, %v725
      %v776 = vsub.f32 %v724, %v726
      %v777 = vsub.f32 %v725, %v727
      %v778 = vsub.f32 %v726, %v728
      %v779 = vsub.f32 %v727, %v729
      %v786 = vrot.slane %v774, 1
      %v787 = vrot.slane %v775, 1
      %v788 = vrot.slane %v776, 1
      %v789 = vrot.slane %v777, 1
      %v790 = vrot.slane %v778, 1
      %v791 = vrot.slane %v779, 1
      %v798 = vadd.f32 %v774, %v786
      %v799 = vadd.f32 %v775, %v787
      %v800 = vadd.f32 %v776, %v788
      %v801 = vadd.f32 %v777, %v789
      %v802 = vadd.f32 %v778, %v790
      %v803 = vadd.f32 %v779, %v791
      %v804 = vrot.slane %v774, 2
      %v805 = vrot.slane %v775, 2
      %v806 = vrot.slane %v776, 2
      %v807 = vrot.slane %v777, 2
      %v808 = vrot.slane %v778, 2
      %v809 = vrot.slane %v779, 2
      %v816 = vadd.f32 %v798, %v804
      %v817 = vadd.f32 %v799, %v805
      %v818 = vadd.f32 %v800, %v806
      %v819 = vadd.f32 %v801, %v807
      %v820 = vadd.f32 %v802, %v808
      %v821 = vadd.f32 %v803, %v809
      %v822 = vmul.f32 %v768, %v768
      %v823 = vmul.f32 %v769, %v769
      %v824 = vmul.f32 %v770, %v770
      %v825 = vmul.f32 %v771, %v771
      %v826 = vmul.f32 %v772, %v772
      %v827 = vmul.f32 %v773, %v773
      %v828 = vmul.f32 %v816, %v816
      %v829 = vmul.f32 %v817, %v817
      %v830 = vmul.f32 %v818, %v818
      %v831 = vmul.f32 %v819, %v819
      %v832 = vmul.f32 %v820, %v820
      %v833 = vmul.f32 %v821, %v821
      %v834 = vadd.f32 %v822, %v828
      %v835 = vadd.f32 %v823, %v829
      %v836 = vadd.f32 %v824, %v830
      %v837 = vadd.f32 %v825, %v831
      %v838 = vadd.f32 %v826, %v832
      %v839 = vadd.f32 %v827, %v833
      %v840 = vmul.f32 %v834, 0.11111111
      %v841 = vmul.f32 %v835, 0.11111111
      %v842 = vmul.f32 %v836, 0.11111111
      %v843 = vmul.f32 %v837, 0.11111111
      %v844 = vmul.f32 %v838, 0.11111111
      %v845 = vmul.f32 %v839, 0.11111111
      %v846 = vmul.f32 %v840, %v604
      %v847 = vmul.f32 %v841, %v605
      %v848 = vmul.f32 %v842, %v606
      %v849 = vmul.f32 %v843, %v607
      %v850 = vmul.f32 %v844, %v608
      %v851 = vmul.f32 %v845, %v609
      %v852 = vrsqrt.pop %v846
      %v853 = vmul.f32 %v846, %v852
      %vm854 = vcmp.eq.f32.partialorder %v846, inf
      %v855 = vsel %vm854, %v846, %v853
      %vm856 = vcmp.eq.f32.partialorder %v846, 0.0
      %v857 = vand.u32 %v846, 2147483648
      %v858 = vsel %vm856, %v857, %v855
      %v859 = vrsqrt.pop %v847
      %v860 = vmul.f32 %v847, %v859
      %vm861 = vcmp.eq.f32.partialorder %v847, inf
      %v862 = vsel %vm861, %v847, %v860
      %vm863 = vcmp.eq.f32.partialorder %v847, 0.0
      %v864 = vand.u32 %v847, 2147483648
      %v865 = vsel %vm863, %v864, %v862
      %v866 = vrsqrt.pop %v848
      %v867 = vmul.f32 %v848, %v866
      %vm868 = vcmp.eq.f32.partialorder %v848, inf
      %v869 = vsel %vm868, %v848, %v867
      %vm870 = vcmp.eq.f32.partialorder %v848, 0.0
      %v871 = vand.u32 %v848, 2147483648
      %v872 = vsel %vm870, %v871, %v869
      %v873 = vrsqrt.pop %v849
      %v874 = vmul.f32 %v849, %v873
      %vm875 = vcmp.eq.f32.partialorder %v849, inf
      %v876 = vsel %vm875, %v849, %v874
      %vm877 = vcmp.eq.f32.partialorder %v849, 0.0
      %v878 = vand.u32 %v849, 2147483648
      %v879 = vsel %vm877, %v878, %v876
      %v880 = vrsqrt.pop %v850
      %v881 = vmul.f32 %v850, %v880
      %vm882 = vcmp.eq.f32.partialorder %v850, inf
      %v883 = vsel %vm882, %v850, %v881
      %vm884 = vcmp.eq.f32.partialorder %v850, 0.0
      %v885 = vand.u32 %v850, 2147483648
      %v886 = vsel %vm884, %v885, %v883
      %v887 = vrsqrt.pop %v851
      %v888 = vmul.f32 %v851, %v887
      %vm889 = vcmp.eq.f32.partialorder %v851, inf
      %v890 = vsel %vm889, %v851, %v888
      %vm891 = vcmp.eq.f32.partialorder %v851, 0.0
      %v892 = vand.u32 %v851, 2147483648
      %v893 = vsel %vm891, %v892, %v890
      %v894 = vmul.f32 %v858, 2.0
      %v895 = vmul.f32 %v865, 2.0
      %v896 = vmul.f32 %v872, 2.0
      %v897 = vmul.f32 %v879, 2.0
      %v898 = vmul.f32 %v886, 2.0
      %v899 = vmul.f32 %v893, 2.0
      %v900 = vadd.f32 %v894, 170.0
      %v901 = vadd.f32 %v895, 170.0
      %v902 = vadd.f32 %v896, 170.0
      %v903 = vadd.f32 %v897, 170.0
      %v904 = vadd.f32 %v898, 170.0
      %v905 = vadd.f32 %v899, 170.0
      %v906 = vadd.f32 %v840, %v604
      %v907 = vadd.f32 %v841, %v605
      %v908 = vadd.f32 %v842, %v606
      %v909 = vadd.f32 %v843, %v607
      %v910 = vadd.f32 %v844, %v608
      %v911 = vadd.f32 %v845, %v609
      %v912 = vadd.f32 %v906, 170.0
      %v913 = vadd.f32 %v907, 170.0
      %v914 = vadd.f32 %v908, 170.0
      %v915 = vadd.f32 %v909, 170.0
      %v916 = vadd.f32 %v910, 170.0
      %v917 = vadd.f32 %v911, 170.0
      %v918 = vrcp.pop %v912
      %v919 = vmul.f32 %v900, %v918
      %v920 = vrcp.pop %v913
      %v921 = vmul.f32 %v901, %v920
      %v922 = vrcp.pop %v914
      %v923 = vmul.f32 %v902, %v922
      %v924 = vrcp.pop %v915
      %v925 = vmul.f32 %v903, %v924
      %v926 = vrcp.pop %v916
      %v927 = vmul.f32 %v904, %v926
      %v928 = vrcp.pop %v917
      %v929 = vmul.f32 %v905, %v928
      %s930 = smul.u32 %s22, 6
      %s931 = ssub.s32 6, %s930
      %p932 = scmp.lt.s32.totalorder %s931, 6
      %s933 = scalar_select %p932, %s931, 6
      %v934 = vstv %s933
      %vm935 = vcmp.gt.s32.totalorder %v934, 0
      %vm936 = vcmp.gt.s32.totalorder %v934, 1
      %vm937 = vcmp.gt.s32.totalorder %v934, 2
      %vm938 = vcmp.gt.s32.totalorder %v934, 3
      %vm939 = vcmp.gt.s32.totalorder %v934, 4
      %vm940 = vcmp.gt.s32.totalorder %v934, 5
      %s941 = smul.u32 %s933, 768
      %s942 = scvt.s32.f32 %s941
      %v943 = vsel %vm935, %v919, 0.0
      %v944 = vsel %vm936, %v921, 0.0
      %v945 = vsel %vm937, %v923, 0.0
      %v946 = vsel %vm938, %v925, 0.0
      %v947 = vsel %vm939, %v927, 0.0
      %v948 = vsel %vm940, %v929, 0.0
      %vm949 = vcmask 1045504
      %v950 = vsel %vm949, %v943, 0.0
      %v951 = vsel %vm949, %v944, 0.0
      %v952 = vadd.f32 %v950, %v951
      %v953 = vsel %vm949, %v945, 0.0
      %v954 = vadd.f32 %v952, %v953
      %v955 = vsel %vm949, %v946, 0.0
      %v956 = vadd.f32 %v954, %v955
      %v957 = vsel %vm949, %v947, 0.0
      %v958 = vadd.f32 %v956, %v957
      %v959 = vsel %vm949, %v948, 0.0
      %v960 = vadd.f32 %v958, %v959
      %961 = vadd.xlane.f32.xlu0 %v960
      %v962 = vpop.xlane.xlu0 %961
      %v963 = vrot.slane %v962, 4
      %v964 = vadd.f32 %v962, %v963
      %v965 = vrot.slane %v964, 2
      %v966 = vadd.f32 %v964, %v965
      %v967 = vrot.slane %v966, 1
      %v968 = vadd.f32 %v966, %v967
      %s969 = vtos %v968
      %v970 = vstv %s942
      %v971 = vrcp.pop %v970
      %s972 = vtos %v971
      %s973 = smul.f32 %s969, %s972
      %v974 = vstv %s973
      %v975 = vsub.f32 %v919, %v974
      %v976 = vsub.f32 %v921, %v974
      %v977 = vsub.f32 %v923, %v974
      %v978 = vsub.f32 %v925, %v974
      %v979 = vsub.f32 %v927, %v974
      %v980 = vsub.f32 %v929, %v974
      %v981 = vsel %vm935, %v975, 0.0
      %v982 = vsel %vm936, %v976, 0.0
      %v983 = vsel %vm937, %v977, 0.0
      %v984 = vsel %vm938, %v978, 0.0
      %v985 = vsel %vm939, %v979, 0.0
      %v986 = vsel %vm940, %v980, 0.0
      %v987 = vstv %s969
      %vm988 = vcmask 0
      %989 = vst.msk [vmem:[%s367] sm:$0x1] %vm988, %v987
      %v990 = vmul.f32 %v981, %v981
      %v991 = vmul.f32 %v982, %v982
      %v992 = vmul.f32 %v983, %v983
      %v993 = vmul.f32 %v984, %v984
      %v994 = vmul.f32 %v985, %v985
      %v995 = vmul.f32 %v986, %v986
      %v996 = vsel %vm949, %v990, 0.0
      %v997 = vsel %vm949, %v991, 0.0
      %v998 = vadd.f32 %v996, %v997
      %v999 = vsel %vm949, %v992, 0.0
      %v1000 = vadd.f32 %v998, %v999
      %v1001 = vsel %vm949, %v993, 0.0
      %v1002 = vadd.f32 %v1000, %v1001
      %v1003 = vsel %vm949, %v994, 0.0
      %v1004 = vadd.f32 %v1002, %v1003
      %v1005 = vsel %vm949, %v995, 0.0
      %v1006 = vadd.f32 %v1004, %v1005
      %1007 = vadd.xlane.f32.xlu0 %v1006
      %v1008 = vpop.xlane.xlu0 %1007
      %v1009 = vrot.slane %v1008, 4
      %v1010 = vadd.f32 %v1008, %v1009
      %v1011 = vrot.slane %v1010, 2
      %v1012 = vadd.f32 %v1010, %v1011
      %v1013 = vrot.slane %v1012, 1
      %v1014 = vadd.f32 %v1012, %v1013
      %s1015 = vtos %v1014
      %v1016 = vstv %s1015
      %1017 = vst.msk [vmem:[%s373] sm:$0x1] %vm988, %v1016
      %p1018 = scmp.lt.s32.totalorder %s21, 1
      %s1019 = scalar_select %p1018, %s21, 1
      %p1020 = scmp.lt.s32.totalorder %s22, 0
      %s1021 = scalar_select %p1020, %s22, 0
      %s1022 = sadd.s32 %s1021, %s1019
      %s1023 = scalar_lea.vmem %s4, %s1022
      %p1024 = scmp.lt.s32.totalorder %s21, 1
      %s1025 = scalar_select %p1024, %s21, 1
      %p1026 = scmp.lt.s32.totalorder %s22, 0
      %s1027 = scalar_select %p1026, %s22, 0
      %s1028 = sadd.s32 %s1027, %s1025
      %s1029 = scalar_lea.vmem %s5, %s1028
      // Predicated region
      $region37: #{gmsd_loss.3} parent=35 // pred_check
        %p1030 = pneg %p161
      $region38: #{gmsd_loss.3} parent=35 // pred_check_branch
        %1032 = sbr.rel (%p1030) target = $region40
      $region39: #{gmsd_loss.3} parent=35 // pred_region
        _
      $region40: #{gmsd_loss.3} parent=35 // pred_fallthru
        _
      // Predicated region
      $region41: #{gmsd_loss.3} parent=35 // pred_check
        %p1033 = pneg %p189
      $region42: #{gmsd_loss.3} parent=35 // pred_check_branch
        %1035 = sbr.rel (%p1033) target = $region44
      $region43: #{gmsd_loss.3} parent=35 // pred_region
        _
      $region44: #{gmsd_loss.3} parent=35 // pred_fallthru
        _
    $region36: #{gmsd_loss.3} parent=5 // pred_fallthru
      _
    %p1036 = scmp.le.s32.totalorder 2, %s12
    // Predicated region
    $region45: #{gmsd_loss.3} parent=5 // pred_check
      %p1037 = pneg %p1036
    $region46: #{gmsd_loss.3} parent=5 // pred_check_branch
      %1039 = sbr.rel (%p1037) target = $region48
    $region47: #{gmsd_loss.3} parent=5 // pred_region
      %s1040 = ssub.s32 %s12, 2
      // Predicated region
      $region49: #{gmsd_loss.3} parent=47 // pred_check
        %p1041 = pneg %p167
      $region50: #{gmsd_loss.3} parent=47 // pred_check_branch
        %1043 = sbr.rel (%p1041) target = $region52
      $region51: #{gmsd_loss.3} parent=47 // pred_region
        %p1044 = scmp.lt.s32.totalorder %s23, 1
        %s1045 = scalar_select %p1044, %s23, 1
        %p1046 = scmp.lt.s32.totalorder %s24, 0
        %s1047 = scalar_select %p1046, %s24, 0
        %s1048 = sadd.s32 %s1047, %s1045
        %s1049 = scalar_lea.vmem %s4, %s1048
      $region52: #{gmsd_loss.3} parent=47 // pred_fallthru
        _
      // Predicated region
      $region53: #{gmsd_loss.3} parent=47 // pred_check
        %p1050 = pneg %p195
      $region54: #{gmsd_loss.3} parent=47 // pred_check_branch
        %1052 = sbr.rel (%p1050) target = $region56
      $region55: #{gmsd_loss.3} parent=47 // pred_region
        %p1053 = scmp.lt.s32.totalorder %s23, 1
        %s1054 = scalar_select %p1053, %s23, 1
        %p1055 = scmp.lt.s32.totalorder %s24, 0
        %s1056 = scalar_select %p1055, %s24, 0
        %s1057 = sadd.s32 %s1056, %s1054
        %s1058 = scalar_lea.vmem %s5, %s1057
      $region56: #{gmsd_loss.3} parent=47 // pred_fallthru
        _
    $region48: #{gmsd_loss.3} parent=5 // pred_fallthru
      _
  $region6: #{gmsd_loss.3} parent=0 // loop_footer
    %s16 = sadd.s32 1, %s12
  $region7: #{gmsd_loss.3} parent=0 // loop_footer_branch
    %11 = sbr.rel target = $region3
  $region8: #{gmsd_loss.3} parent=0 // loop_exit
    _

</llo_original>
